<compile_context>
chip_gen: v7x
topology: tpu7x:2x2x1
jax: 0.10.0
libtpu: 0.0.40
codegen_flags: <defaults>
</compile_context>

<pallas_src>
import jax
import jax.numpy as jnp
from jax.experimental import pallas as pl
from jax.experimental.pallas import tpu as pltpu

HIDDEN = 256
SUBLANE = 8
TB_CAP = 2048                       # rows per tile upper bound
VMEM_TILE_BUDGET = 36 * 1024 * 1024  # bytes budgeted for tiles + temps
VMEM_LIMIT_BYTES = 48 * 1024 * 1024  # fits v5e/v6e/v7x physical VMEM
MEGACORE_MIN_TILE = 512              # only split a lone tile if halves stay >= this


def _round_up(n, m):
    return ((n + m - 1) // m) * m


def _discriminator_kernel(x_ref, w1_ref, b1_ref, w2_ref, b2_ref, o_ref):
    # x: (TB, E) f32/bf16, w1: (E, 256) bf16, b1: (1, 256) f32,
    # w2: (256, 1) bf16 column, b2: (1, 1) f32, o: (TB, 1) f32.

    # fc1 on the MXU: bf16 operands, f32 accumulation.
    x_bf = x_ref[...].astype(jnp.bfloat16)          # no-op if x is already bf16
    h = jnp.dot(x_bf, w1_ref[...], preferred_element_type=jnp.float32)
    h = h + b1_ref[...]

    # LeakyReLU(0.01): mul + max (2 VALU ops per vreg vs 3 for where).
    h = jnp.maximum(h, 0.01 * h)

    # fc2 also on the MXU (N=1 column) — avoids the XLU lane reduction over 256.
    z = jnp.dot(h.astype(jnp.bfloat16), w2_ref[...],
                preferred_element_type=jnp.float32) + b2_ref[...]

    # Exact sigmoid (approx reciprocal could leak slightly outside [0, 1]).
    o_ref[...] = 1.0 / (1.0 + jnp.exp(-z))


def _pick_batch_tile(B, E, x_itemsize):
    """Balanced, VMEM-budgeted batch tile; returns (tb, grid)."""
    if B <= SUBLANE:
        return B, 1  # block equals full dim -> always legal

    # Per-row VMEM bytes: double-buffered x tile, bf16 cast copy, f32 h, misc.
    per_row = 2 * x_itemsize * E + 2 * E + 4 * HIDDEN + 16
    # Resident (double-buffered) weights/biases.
    resident = 2 * (E * HIDDEN * 2 + HIDDEN * 4 + HIDDEN * 2 + 4)
    tb_cap = min(TB_CAP, max(SUBLANE, (VMEM_TILE_BUDGET - resident) // per_row))

    n_tiles = pl.cdiv(B, tb_cap)
    if n_tiles == 1 and B >= 2 * MEGACORE_MIN_TILE:
        n_tiles = 2  # give v7x's second TensorCore work

    tb = _round_up(pl.cdiv(B, n_tiles), SUBLANE)
    tb = min(tb, (B // SUBLANE) * SUBLANE)  # keep tb a legal multiple of 8, <= B
    return tb, pl.cdiv(B, tb)


def discriminator_forward(x, params):
    """x: (B, emb_dim) float32 or bfloat16 -> (B, 1) float32 sigmoid scores."""
    w1, b1, w2_col, b2 = params
    B, E = x.shape
    assert w1.shape == (E, HIDDEN) and w2_col.shape == (HIDDEN, 1)

    tb, num_tiles = _pick_batch_tile(B, E, x.dtype.itemsize)

    out = pl.pallas_call(
        _discriminator_kernel,
        out_shape=jax.ShapeDtypeStruct((B, 1), jnp.float32),
        grid=(num_tiles,),
        in_specs=[
            pl.BlockSpec((tb, E), lambda i: (i, 0)),         # x: tiled over batch
            pl.BlockSpec((E, HIDDEN), lambda i: (0, 0)),     # w1: resident
            pl.BlockSpec((1, HIDDEN), lambda i: (0, 0)),     # b1: resident
            pl.BlockSpec((HIDDEN, 1), lambda i: (0, 0)),     # w2 column: resident
            pl.BlockSpec((1, 1), lambda i: (0, 0)),          # b2: resident
        ],
        out_specs=pl.BlockSpec((tb, 1), lambda i: (i, 0)),
        compiler_params=pltpu.CompilerParams(
            dimension_semantics=("parallel",),
            vmem_limit_bytes=VMEM_LIMIT_BYTES,
        ),
    )(x, w1, b1, w2_col, b2)
    return out


def init_params(key, emb_dim, hidden=HIDDEN):
    """Torch nn.Linear-style init (U[-1/sqrt(fan_in), 1/sqrt(fan_in)]), f32.

    Weights stored as (in_features, out_features); fc2 kept as a (hidden, 1) column.
    """
    k1, k2, k3, k4 = jax.random.split(key, 4)
    bound1 = 1.0 / jnp.sqrt(emb_dim)
    bound2 = 1.0 / jnp.sqrt(hidden)
    w1 = jax.random.uniform(k1, (emb_dim, hidden), jnp.float32, -bound1, bound1)
    b1 = jax.random.uniform(k2, (1, hidden), jnp.float32, -bound1, bound1)
    w2_col = jax.random.uniform(k3, (hidden, 1), jnp.float32, -bound2, bound2)
    b2 = jax.random.uniform(k4, (1, 1), jnp.float32, -bound2, bound2)
    return w1, b1, w2_col, b2


def prepare_params(params):
    """Cast the matmul operands to bf16 for the MXU (biases stay f32)."""
    w1, b1, w2_col, b2 = params
    return w1.astype(jnp.bfloat16), b1, w2_col.astype(jnp.bfloat16), b2


if __name__ == "__main__":
    key = jax.random.PRNGKey(0)
    kx, kp = jax.random.split(key)

    B, EMB = 8, 32
    x = jax.random.normal(kx, (B, EMB), jnp.float32)
    params_f32 = init_params(kp, EMB)
    params_kernel = prepare_params(params_f32)

    out = discriminator_forward(x, params_kernel)
    out = jax.block_until_ready(out)

    # Pure-JAX f32 reference (kernel uses bf16 matmul operands -> loosened tol).
    w1, b1, w2_col, b2 = params_f32
    h_ref = x @ w1 + b1
    h_ref = jnp.where(h_ref >= 0, h_ref, 0.01 * h_ref)
    ref = jax.nn.sigmoid(h_ref @ w2_col + b2)

    assert out.shape == (B, 1)
    assert jnp.allclose(out, ref, atol=2e-2, rtol=0.0), (
        f"max abs diff {jnp.max(jnp.abs(out - ref))}"
    )

    print("KERNEL_OK")
</pallas_src>

<mosaic_0001>
module attributes {stable_mosaic.version = 11 : i64} {
  func.func @_discriminator_kernel(%arg0: i32, %arg1: memref<8x32xf32, #tpu.memory_space<vmem>>, %arg2: memref<32x256xbf16, #tpu.memory_space<vmem>>, %arg3: memref<1x256xf32, #tpu.memory_space<vmem>>, %arg4: memref<256x1xbf16, #tpu.memory_space<vmem>>, %arg5: memref<1x1xf32, #tpu.memory_space<vmem>>, %arg6: memref<8x1xf32, #tpu.memory_space<vmem>>) attributes {dimension_semantics = [#tpu.dimension_semantics<parallel>], iteration_bounds = array<i64: 1>, scalar_prefetch = 0 : i64, scratch_operands = 0 : i64, tpu.core_type = #tpu.core_type<tc>, window_params = [{transform_indices = @transform_0, window_bounds = array<i64: 8, 32>}, {pipeline_mode = #tpu.pipeline_mode<synchronous>, transform_indices = @transform_1, window_bounds = array<i64: 32, 256>}, {pipeline_mode = #tpu.pipeline_mode<synchronous>, transform_indices = @transform_2, window_bounds = array<i64: 1, 256>}, {pipeline_mode = #tpu.pipeline_mode<synchronous>, transform_indices = @transform_3, window_bounds = array<i64: 256, 1>}, {pipeline_mode = #tpu.pipeline_mode<synchronous>, transform_indices = @transform_4, window_bounds = array<i64: 1, 1>}, {transform_indices = @transform_5, window_bounds = array<i64: 8, 1>}]} {
    %c0 = arith.constant 0 : index
    %c0_0 = arith.constant 0 : index
    %0 = vector.load %arg1[%c0, %c0_0] : memref<8x32xf32, #tpu.memory_space<vmem>>, vector<8x32xf32>
    %1 = arith.truncf %0 : vector<8x32xf32> to vector<8x32xbf16>
    %c0_1 = arith.constant 0 : index
    %c0_2 = arith.constant 0 : index
    %2 = vector.load %arg2[%c0_1, %c0_2] : memref<32x256xbf16, #tpu.memory_space<vmem>>, vector<32x256xbf16>
    %cst = arith.constant dense<0.000000e+00> : vector<8x256xf32>
    %3 = tpu.matmul %1, %2, %cst {dimension_numbers = #tpu.dot_dimension_numbers<[1], [0], [0], [1], [0, 0, 1, 1], [], []>} : vector<8x32xbf16>, vector<32x256xbf16>, vector<8x256xf32> -> vector<8x256xf32>
    %c0_3 = arith.constant 0 : index
    %c0_4 = arith.constant 0 : index
    %4 = vector.load %arg3[%c0_3, %c0_4] : memref<1x256xf32, #tpu.memory_space<vmem>>, vector<1x256xf32>
    %5 = vector.broadcast %4 : vector<1x256xf32> to vector<8x256xf32>
    %6 = arith.addf %3, %5 : vector<8x256xf32>
    %cst_5 = arith.constant 0.00999999977 : f32
    %7 = vector.broadcast %cst_5 : f32 to vector<8x256xf32>
    %8 = arith.mulf %7, %6 : vector<8x256xf32>
    %9 = arith.maximumf %6, %8 : vector<8x256xf32>
    %10 = arith.truncf %9 : vector<8x256xf32> to vector<8x256xbf16>
    %c0_6 = arith.constant 0 : index
    %c0_7 = arith.constant 0 : index
    %11 = vector.load %arg4[%c0_6, %c0_7] : memref<256x1xbf16, #tpu.memory_space<vmem>>, vector<256x1xbf16>
    %cst_8 = arith.constant dense<0.000000e+00> : vector<8x1xf32>
    %12 = tpu.matmul %10, %11, %cst_8 {dimension_numbers = #tpu.dot_dimension_numbers<[1], [0], [0], [1], [0, 0, 1, 1], [], []>} : vector<8x256xbf16>, vector<256x1xbf16>, vector<8x1xf32> -> vector<8x1xf32>
    %c0_9 = arith.constant 0 : index
    %c0_10 = arith.constant 0 : index
    %13 = vector.load %arg5[%c0_9, %c0_10] : memref<1x1xf32, #tpu.memory_space<vmem>>, vector<1x1xf32>
    %14 = vector.broadcast %13 : vector<1x1xf32> to vector<8x1xf32>
    %15 = arith.addf %12, %14 : vector<8x1xf32>
    %cst_11 = arith.constant 0.000000e+00 : f32
    %16 = vector.broadcast %cst_11 : f32 to vector<8x1xf32>
    %17 = arith.subf %16, %15 : vector<8x1xf32>
    %18 = math.exp %17 : vector<8x1xf32>
    %cst_12 = arith.constant 1.000000e+00 : f32
    %19 = vector.broadcast %cst_12 : f32 to vector<8x1xf32>
    %20 = arith.addf %19, %18 : vector<8x1xf32>
    %cst_13 = arith.constant 1.000000e+00 : f32
    %21 = vector.broadcast %cst_13 : f32 to vector<8x1xf32>
    %22 = arith.divf %21, %20 : vector<8x1xf32>
    %c0_14 = arith.constant 0 : index
    %c0_15 = arith.constant 0 : index
    %23 = vector.load %arg6[%c0_14, %c0_15] : memref<8x1xf32, #tpu.memory_space<vmem>>, vector<8x1xf32>
    tpu.vector_store %arg6[%c0_14, %c0_15], %22 {strides = array<i32>} : memref<8x1xf32, #tpu.memory_space<vmem>>, vector<8x1xf32>,
    return
  }
  func.func @transform_0(%arg0: i32) -> (i32, i32) {
    %c0_i32 = arith.constant 0 : i32
    %c0_i32_0 = arith.constant 0 : i32
    return %arg0, %c0_i32 : i32, i32
  }
  func.func @transform_1(%arg0: i32) -> (i32, i32) {
    %c0_i32 = arith.constant 0 : i32
    %c0_i32_0 = arith.constant 0 : i32
    %c0_i32_1 = arith.constant 0 : i32
    return %c0_i32, %c0_i32_0 : i32, i32
  }
  func.func @transform_2(%arg0: i32) -> (i32, i32) {
    %c0_i32 = arith.constant 0 : i32
    %c0_i32_0 = arith.constant 0 : i32
    %c0_i32_1 = arith.constant 0 : i32
    return %c0_i32, %c0_i32_0 : i32, i32
  }
  func.func @transform_3(%arg0: i32) -> (i32, i32) {
    %c0_i32 = arith.constant 0 : i32
    %c0_i32_0 = arith.constant 0 : i32
    %c0_i32_1 = arith.constant 0 : i32
    return %c0_i32, %c0_i32_0 : i32, i32
  }
  func.func @transform_4(%arg0: i32) -> (i32, i32) {
    %c0_i32 = arith.constant 0 : i32
    %c0_i32_0 = arith.constant 0 : i32
    %c0_i32_1 = arith.constant 0 : i32
    return %c0_i32, %c0_i32_0 : i32, i32
  }
  func.func @transform_5(%arg0: i32) -> (i32, i32) {
    %c0_i32 = arith.constant 0 : i32
    %c0_i32_0 = arith.constant 0 : i32
    return %arg0, %c0_i32 : i32, i32
  }
}

</mosaic_0001>

<llo_original>
// kernel: tpu_custom_call.1
$region0: #{tpu_custom_call.1}
  #allocation0 [shape = 'u32[]', space=smem, size = 0x4, offset = 0x4, fixed_abs, tag = 'smem constant byte address 0x4 - core index']
  #allocation1 [shape = 'u32[144,128]{1,0:T(1,128)}', space=vmem, size = 0x12000, scoped, tag = 'internal scratch']
  #allocation2 [shape = 'f32[1,1]{1,0:T(1,128)S(1)}', space=vmem, size = 0x200, scoped, tag = 'scoped memory for tpu_custom_call.1']
  %s0 = inlined_call_operand.vmem [shape: f32[8,32], index: 0, kind: input, shape index: {}]
  %s1 = inlined_call_operand.vmem [shape: bf16[32,256], index: 1, kind: input, shape index: {}]
  %s2 = inlined_call_operand.vmem [shape: f32[1,256], index: 2, kind: input, shape index: {}]
  %s3 = inlined_call_operand.vmem [shape: bf16[256,1], index: 3, kind: input, shape index: {}]
  %s4 = inlined_call_operand.<no memory space> [shape: f32[1,1], index: 4, kind: input, shape index: {}]
  %s5 = inlined_call_operand.vmem [shape: f32[8,1], index: 5, kind: output, shape index: {}]
  %s6 = sld [smem:[#allocation0]]
  $region30: #{tpu_custom_call.1} parent=0
    _
  %s8 = ssub.s32 1, %s6
  %s9 = scalar_select 0, %s8, %s6
  %v10 = vstv %s4
  %11 = vst [vmem:[#allocation2] sm:$0x1] %v10
  // Predicated region
  $region2: #{tpu_custom_call.1} parent=0 // pred_check
    _
  $region3: #{tpu_custom_call.1} parent=0 // pred_check_branch
    %13 = sbr.rel (0) target = $region5
  $region4: #{tpu_custom_call.1} parent=0 // pred_region
    _
  $region5: #{tpu_custom_call.1} parent=0 // pred_fallthru
    _
  // Predicated region
  $region6: #{tpu_custom_call.1} parent=0 // pred_check
    _
  $region7: #{tpu_custom_call.1} parent=0 // pred_check_branch
    %15 = sbr.rel (0) target = $region9
  $region8: #{tpu_custom_call.1} parent=0 // pred_region
    _
  $region9: #{tpu_custom_call.1} parent=0 // pred_fallthru
    _
  // Predicated region
  $region10: #{tpu_custom_call.1} parent=0 // pred_check
    _
  $region11: #{tpu_custom_call.1} parent=0 // pred_check_branch
    %17 = sbr.rel (0) target = $region13
  $region12: #{tpu_custom_call.1} parent=0 // pred_region
    _
  $region13: #{tpu_custom_call.1} parent=0 // pred_fallthru
    _
  // Predicated region
  $region14: #{tpu_custom_call.1} parent=0 // pred_check
    _
  $region15: #{tpu_custom_call.1} parent=0 // pred_check_branch
    %19 = sbr.rel (0) target = $region17
  $region16: #{tpu_custom_call.1} parent=0 // pred_region
    _
  $region17: #{tpu_custom_call.1} parent=0 // pred_fallthru
    _
  // Predicated region
  $region18: #{tpu_custom_call.1} parent=0 // pred_check
    _
  $region19: #{tpu_custom_call.1} parent=0 // pred_check_branch
    %21 = sbr.rel (0) target = $region21
  $region20: #{tpu_custom_call.1} parent=0 // pred_region
    _
  $region21: #{tpu_custom_call.1} parent=0 // pred_fallthru
    _
  %v23 = vld [vmem:[%s0] sm:$0xff]
  %v24 = vpack.c.bf16 %v23, %v23
  %v25 = vld [vmem:[%s1] sm:$0xff]
  %v26 = vld [vmem:[%s1 + $0x8] sm:$0xff]
  %v27 = vld [vmem:[%s1 + $0x10] sm:$0xff]
  %v28 = vld [vmem:[%s1 + $0x18] sm:$0xff]
  %v29 = vld [vmem:[%s2] sm:$0x3]
  %v31 = vlaneseq
  %v32 = vshrl.u32 %v31, 7
  %v33 = vsub.s32 0, %v32
  %v34 = vrot.slane %v29, %v33
  %v35 = vlaneseq
  %v36 = vshrl.u32 %v35, 7
  %v37 = vsub.s32 1, %v36
  %v38 = vrot.slane %v29, %v37
  %v45 = vunpack.c.l.b16 %v25
  %v46 = vunpack.c.h.b16 %v25
  %v47 = vunpack.c.l.b16 %v26
  %v48 = vunpack.c.h.b16 %v26
  %v49 = vunpack.c.l.b16 %v27
  %v50 = vunpack.c.h.b16 %v27
  %v51 = vunpack.c.l.b16 %v28
  %v52 = vunpack.c.h.b16 %v28
  %v53 = vpack.c.b16 %v47, %v45
  %v54 = vpack.c.b16 %v48, %v46
  %v55 = vpack.c.b16 %v51, %v49
  %v56 = vpack.c.b16 %v52, %v50
  %vm61 = vcmask 261120
  %v63 = vsel %vm61, %v24, 0
  %65 = vmatprep.subr.bf16.mxu0 %v54
  %66 = vmatpush1.bf16.msra.mxu0 %v53
  %67 = vmatprep.subr.bf16.mxu0 %v56
  %68 = vmatpush1.bf16.msra.mxu0 %v55
  %69 = vmatprep.subr.bf16.mxu0 0
  %70 = vmatpush1.bf16.msra.mxu0 0
  %71 = vmatprep.subr.bf16.mxu0 0
  %72 = vmatpush1.bf16.msra.mxu0 0
  %73 = vmatprep.subr.bf16.mxu0 0
  %74 = vmatpush1.bf16.msra.mxu0 0
  %75 = vmatprep.subr.bf16.mxu0 0
  %76 = vmatpush1.bf16.msra.mxu0 0
  %77 = vmatprep.subr.bf16.mxu0 0
  %78 = vmatpush1.bf16.msra.mxu0 0
  %79 = vmatprep.subr.bf16.mxu0 0
  %80 = vmatpush1.bf16.msra.mxu0 0
  %81 = vmatprep.subr.bf16.mxu0 0
  %82 = vmatpush1.bf16.msra.mxu0 0
  %83 = vmatprep.subr.bf16.mxu0 0
  %84 = vmatpush1.bf16.msra.mxu0 0
  %85 = vmatprep.subr.bf16.mxu0 0
  %86 = vmatpush1.bf16.msra.mxu0 0
  %87 = vmatprep.subr.bf16.mxu0 0
  %88 = vmatpush1.bf16.msra.mxu0 0
  %89 = vmatprep.subr.bf16.mxu0 0
  %90 = vmatpush1.bf16.msra.mxu0 0
  %91 = vmatprep.subr.bf16.mxu0 0
  %92 = vmatpush1.bf16.msra.mxu0 0
  %93 = vmatprep.subr.bf16.mxu0 0
  %94 = vmatpush1.bf16.msra.mxu0 0
  %95 = vmatprep.subr.bf16.mxu0 0
  %96 = vmatpush1.bf16.msra.mxu0 0
  %97 = vmatprep.mubr.bf16.mxu0 0
  %98 = vmatmul.mubr.bf16.gmra.mrb[0].mxu0 %v63
  %v99 = vpop.f32.mrb[0].mxu0
  %v100 = vadd.f32 %v34, %v99
  %v101 = vpop.f32.mrb[0].mxu0
  %v102 = vadd.f32 %v38, %v101
  %v103 = vpop.f32.mrb[0].mxu0
  %v104 = vpop.f32.mrb[0].mxu0
  %105 = vdwg.mxu0
  %v106 = vmul.f32 %v100, 0.01
  %v107 = vmul.f32 %v102, 0.01
  %v108 = vmax.f32 %v100, %v106
  %v109 = vmax.f32 %v102, %v107
  %v110 = vpack.c.bf16 %v108, %v108
  %v111 = vpack.c.bf16 %v109, %v109
  %v112 = vld [vmem:[%s3] sm:$0xf]
  %v113 = vld [vmem:[%s3 + $0x4] sm:$0xf]
  %v114 = vld [vmem:[%s3 + $0x8] sm:$0xf]
  %v115 = vld [vmem:[%s3 + $0xc] sm:$0xf]
  %v116 = vld [vmem:[%s3 + $0x10] sm:$0xf]
  %v117 = vld [vmem:[%s3 + $0x14] sm:$0xf]
  %v118 = vld [vmem:[%s3 + $0x18] sm:$0xf]
  %v119 = vld [vmem:[%s3 + $0x1c] sm:$0xf]
  %v120 = vld [vmem:[%s3 + $0x20] sm:$0xf]
  %v121 = vld [vmem:[%s3 + $0x24] sm:$0xf]
  %v122 = vld [vmem:[%s3 + $0x28] sm:$0xf]
  %v123 = vld [vmem:[%s3 + $0x2c] sm:$0xf]
  %v124 = vld [vmem:[%s3 + $0x30] sm:$0xf]
  %v125 = vld [vmem:[%s3 + $0x34] sm:$0xf]
  %v126 = vld [vmem:[%s3 + $0x38] sm:$0xf]
  %v127 = vld [vmem:[%s3 + $0x3c] sm:$0xf]
  %v128 = vld [vmem:[%s3 + $0x40] sm:$0xf]
  %v129 = vld [vmem:[%s3 + $0x44] sm:$0xf]
  %v130 = vld [vmem:[%s3 + $0x48] sm:$0xf]
  %v131 = vld [vmem:[%s3 + $0x4c] sm:$0xf]
  %v132 = vld [vmem:[%s3 + $0x50] sm:$0xf]
  %v133 = vld [vmem:[%s3 + $0x54] sm:$0xf]
  %v134 = vld [vmem:[%s3 + $0x58] sm:$0xf]
  %v135 = vld [vmem:[%s3 + $0x5c] sm:$0xf]
  %v136 = vld [vmem:[%s3 + $0x60] sm:$0xf]
  %v137 = vld [vmem:[%s3 + $0x64] sm:$0xf]
  %v138 = vld [vmem:[%s3 + $0x68] sm:$0xf]
  %v139 = vld [vmem:[%s3 + $0x6c] sm:$0xf]
  %v140 = vld [vmem:[%s3 + $0x70] sm:$0xf]
  %v141 = vld [vmem:[%s3 + $0x74] sm:$0xf]
  %v142 = vld [vmem:[%s3 + $0x78] sm:$0xf]
  %v143 = vld [vmem:[%s3 + $0x7c] sm:$0xf]
  %v144 = vld [vmem:[#allocation2] sm:$0x1]
  %v146 = vlaneseq
  %v147 = vshrl.u32 %v146, 7
  %v148 = vsub.s32 0, %v147
  %v149 = vrot.slane %v144, %v148
  %v183 = vunpack.c.l.b16 %v112
  %v184 = vunpack.c.l.b16 %v113
  %v185 = vunpack.c.l.b16 %v114
  %v186 = vunpack.c.l.b16 %v115
  %v187 = vunpack.c.l.b16 %v116
  %v188 = vunpack.c.l.b16 %v117
  %v189 = vunpack.c.l.b16 %v118
  %v190 = vunpack.c.l.b16 %v119
  %v191 = vunpack.c.l.b16 %v120
  %v192 = vunpack.c.l.b16 %v121
  %v193 = vunpack.c.l.b16 %v122
  %v194 = vunpack.c.l.b16 %v123
  %v195 = vunpack.c.l.b16 %v124
  %v196 = vunpack.c.l.b16 %v125
  %v197 = vunpack.c.l.b16 %v126
  %v198 = vunpack.c.l.b16 %v127
  %v199 = vunpack.c.l.b16 %v128
  %v200 = vunpack.c.l.b16 %v129
  %v201 = vunpack.c.l.b16 %v130
  %v202 = vunpack.c.l.b16 %v131
  %v203 = vunpack.c.l.b16 %v132
  %v204 = vunpack.c.l.b16 %v133
  %v205 = vunpack.c.l.b16 %v134
  %v206 = vunpack.c.l.b16 %v135
  %v207 = vunpack.c.l.b16 %v136
  %v208 = vunpack.c.l.b16 %v137
  %v209 = vunpack.c.l.b16 %v138
  %v210 = vunpack.c.l.b16 %v139
  %v211 = vunpack.c.l.b16 %v140
  %v212 = vunpack.c.l.b16 %v141
  %v213 = vunpack.c.l.b16 %v142
  %v214 = vunpack.c.l.b16 %v143
  %v215 = vpack.c.b16 %v184, %v183
  %v216 = vpack.c.b16 %v186, %v185
  %v217 = vpack.c.b16 %v188, %v187
  %v218 = vpack.c.b16 %v190, %v189
  %v219 = vpack.c.b16 %v192, %v191
  %v220 = vpack.c.b16 %v194, %v193
  %v221 = vpack.c.b16 %v196, %v195
  %v222 = vpack.c.b16 %v198, %v197
  %v223 = vpack.c.b16 %v200, %v199
  %v224 = vpack.c.b16 %v202, %v201
  %v225 = vpack.c.b16 %v204, %v203
  %v226 = vpack.c.b16 %v206, %v205
  %v227 = vpack.c.b16 %v208, %v207
  %v228 = vpack.c.b16 %v210, %v209
  %v229 = vpack.c.b16 %v212, %v211
  %v230 = vpack.c.b16 %v214, %v213
  %247 = vmatprep.subr.bf16.mxu0 0
  %248 = vmatpush1.bf16.msra.mxu0 %v215
  %249 = vmatprep.subr.bf16.mxu0 0
  %250 = vmatpush1.bf16.msra.mxu0 %v216
  %251 = vmatprep.subr.bf16.mxu0 0
  %252 = vmatpush1.bf16.msra.mxu0 %v217
  %253 = vmatprep.subr.bf16.mxu0 0
  %254 = vmatpush1.bf16.msra.mxu0 %v218
  %255 = vmatprep.subr.bf16.mxu0 0
  %256 = vmatpush1.bf16.msra.mxu0 %v219
  %257 = vmatprep.subr.bf16.mxu0 0
  %258 = vmatpush1.bf16.msra.mxu0 %v220
  %259 = vmatprep.subr.bf16.mxu0 0
  %260 = vmatpush1.bf16.msra.mxu0 %v221
  %261 = vmatprep.subr.bf16.mxu0 0
  %262 = vmatpush1.bf16.msra.mxu0 %v222
  %263 = vmatprep.subr.bf16.mxu0 0
  %264 = vmatpush1.bf16.msra.mxu0 %v223
  %265 = vmatprep.subr.bf16.mxu0 0
  %266 = vmatpush1.bf16.msra.mxu0 %v224
  %267 = vmatprep.subr.bf16.mxu0 0
  %268 = vmatpush1.bf16.msra.mxu0 %v225
  %269 = vmatprep.subr.bf16.mxu0 0
  %270 = vmatpush1.bf16.msra.mxu0 %v226
  %271 = vmatprep.subr.bf16.mxu0 0
  %272 = vmatpush1.bf16.msra.mxu0 %v227
  %273 = vmatprep.subr.bf16.mxu0 0
  %274 = vmatpush1.bf16.msra.mxu0 %v228
  %275 = vmatprep.subr.bf16.mxu0 0
  %276 = vmatpush1.bf16.msra.mxu0 %v229
  %277 = vmatprep.subr.bf16.mxu0 0
  %278 = vmatpush1.bf16.msra.mxu0 %v230
  %279 = vmatprep.mubr.bf16.mxu0 %v111
  %280 = vmatmul.mubr.bf16.gmra.mrb[0].mxu0 %v110
  %v281 = vpop.f32.mrb[0].mxu0
  %v282 = vadd.f32 %v149, %v281
  %v283 = vpop.f32.mrb[0].mxu0
  %v284 = vpop.f32.mrb[0].mxu0
  %v285 = vpop.f32.mrb[0].mxu0
  %286 = vdwg.mxu0
  %v287 = vsub.f32 0.0, %v282
  %v288 = vmul.f32 %v287, 1.442695
  %v289 = vpow.pop %v288
  %v290 = vadd.f32 %v289, 1.0
  %v291 = vrcp.pop %v290
  %v292 = vmul.f32 1.0, %v291
  %vm293 = vcmask 7168
  %294 = vst.msk [vmem:[%s5] sm:$0xff] %vm293, %v292
  // Predicated region
  $region22: #{tpu_custom_call.1} parent=0 // pred_check
    _
  $region23: #{tpu_custom_call.1} parent=0 // pred_check_branch
    %296 = sbr.rel (0) target = $region25
  $region24: #{tpu_custom_call.1} parent=0 // pred_region
    _
  $region25: #{tpu_custom_call.1} parent=0 // pred_fallthru
    _
  // Predicated region
  $region26: #{tpu_custom_call.1} parent=0 // pred_check
    _
  $region27: #{tpu_custom_call.1} parent=0 // pred_check_branch
    %298 = sbr.rel (0) target = $region29
  $region28: #{tpu_custom_call.1} parent=0 // pred_region
    _
  $region29: #{tpu_custom_call.1} parent=0 // pred_fallthru
    _

</llo_original>
